<compile_context>
chip_gen: v6e
topology: v6e:2x2x1
jax: 0.10.0
libtpu: 0.0.40
codegen_flags: <defaults>
</compile_context>

<pallas_src>
import functools

import jax
import jax.numpy as jnp
from jax.experimental import pallas as pl
from jax.experimental.pallas import tpu as pltpu


def _round_up(x, m):
    return ((x + m - 1) // m) * m


def _pad2(x, rows, cols):
    r, c = x.shape
    return jnp.pad(x, ((0, rows - r), (0, cols - c)))


def _vmem_capacity_bytes():
    """Physical per-TensorCore VMEM; falls back to the smallest generation."""
    try:
        info = pltpu.get_tpu_info()
        for name in ("vmem_capacity_bytes", "vmem_size_bytes", "vmem_bytes"):
            v = getattr(info, name, None)
            if v:
                return int(v)
    except Exception:
        pass
    return 64 * 1024 * 1024          # conservative: v7x per-TC VMEM


def social_encoder_kernel(self_ref, clu_ref, adj_ref, u2e_ref, w_ref, b_ref,
                          o_ref, neigh_acc, *, tn, u2e_resident):
    """Grid = (batch_tiles, neighbor_tiles); neighbor axis is the reduction."""
    k = pl.program_id(1)

    @pl.when(k == 0)
    def _():
        neigh_acc[...] = jnp.zeros_like(neigh_acc)

    if u2e_resident and tn != u2e_ref.shape[0]:
        # resident table: slice the current neighbor tile out of VMEM
        off = pl.multiple_of(k * tn, 128)
        u2e_tile = u2e_ref[pl.ds(off, tn), :]
    else:
        u2e_tile = u2e_ref[...]

    # mean-aggregation partial sum: (tb, tn) @ (tn, Dp), f32 accumulation on MXU
    neigh_acc[...] += jnp.dot(adj_ref[...], u2e_tile,
                              preferred_element_type=jnp.float32)

    @pl.when(k == pl.num_programs(1) - 1)
    def _():
        # split linear == concat([self, neigh, cluster]) @ W^T, done as a single
        # K = 3*Dp matmul against the resident weight slab (better MXU cadence
        # than three K = Dp dots).
        feats = jnp.concatenate(
            [self_ref[...], neigh_acc[...].astype(jnp.bfloat16), clu_ref[...]],
            axis=1)                                    # (tb, 3*Dp) bf16
        h = jnp.dot(feats, w_ref[...], preferred_element_type=jnp.float32)
        h = h + b_ref[...]                             # (1, Dp) f32 broadcast
        o_ref[...] = jnp.maximum(h, 0.0).astype(o_ref.dtype)
        # TODO(synk): training-mode Dropout(p=0.5) omitted (eval-mode identity);
        #             add with pltpu.prng_seed + pltpu.stateful_bernoulli if
        #             training parity is ever needed.


def social_encoder_forward(nodes, u2e_weight, base_weight, cluster_ids,
                           adj_norm, w_linear, b_linear, *,
                           max_tb=512, max_tn=2048,
                           force_stream_u2e=False,
                           vmem_limit_bytes=None):
    """nodes: (B,) int32; u2e_weight: (N, D); base_weight: (C, D);
    cluster_ids: (N,) int32; adj_norm: (N, N) row-normalized adjacency
    (mean aggregator); w_linear: (D, 3D) = nn.Linear(3D, D).weight;
    b_linear: (D,)."""
    B = nodes.shape[0]
    N, D = u2e_weight.shape
    bf = jnp.bfloat16

    # Cast the big tables to bf16 ONCE, before gathering/padding: the (B, N)
    # adjacency slab and the feature gathers are then written a single time,
    # already in bf16 (cuts wrapper-side HBM traffic on a mem-bound op).
    u2e_bf = u2e_weight.astype(bf)
    adj_bf = adj_norm.astype(bf)
    base_bf = base_weight.astype(bf)

    # ---- plain-JAX glue: gathers ---------------------------------------------
    # TODO(synk): for sparse social graphs, replace the dense (B,N)@(N,D) mean
    #             aggregation with scalar-prefetched neighbor lists + DMA row
    #             gather + segment mean (O(E*D) instead of O(B*N*D)); the dense
    #             path is kept for small/dense N.
    self_feats = u2e_bf[nodes]                          # (B, D)
    clu_feats = base_bf[cluster_ids[nodes]]             # (B, D)
    adj_rows = adj_bf[nodes]                            # (B, N) mean-agg rows

    # ---- lane-dense padding + tiling ------------------------------------------
    D_pad = _round_up(D, 128)
    N_pad = _round_up(N, 128)

    B_pad = _round_up(B, 8)
    tb = min(_round_up(max_tb, 8), B_pad)
    if B_pad // tb < 2 and B_pad >= 16:
        # v7x has 2 TensorCores: keep >= 2 batch tiles on the "parallel" axis
        tb = _round_up(B_pad // 2, 8)
    B_pad = _round_up(B_pad, tb)
    nb = B_pad // tb

    tn_max = _round_up(min(max_tn, N_pad), 128)
    nk = max(1, -(-N_pad // tn_max))
    tn = _round_up(-(-N_pad // nk), 128)
    N_pad = nk * tn

    self_p = _pad2(self_feats, B_pad, D_pad)
    clu_p = _pad2(clu_feats, B_pad, D_pad)
    adj_p = _pad2(adj_rows, B_pad, N_pad)
    u2e_p = _pad2(u2e_bf, N_pad, D_pad)

    wt = w_linear.T.astype(bf)                           # (3D, D): [self|neigh|clu]
    w_slab = jnp.concatenate(
        [_pad2(wt[i * D:(i + 1) * D], D_pad, D_pad) for i in range(3)], axis=0)
    bias = _pad2(b_linear.reshape(1, D).astype(jnp.float32), 1, D_pad)

    # ---- VMEM budgeting / u2e residency (generation aware) --------------------
    vmem_cap = _vmem_capacity_bytes()

    def vmem_use(resident):
        u = 2 * 2 * (tb * D_pad * 2)                       # self + clu (2 buffers)
        u += 2 * (tb * tn * 2)                             # adjacency tile
        u += 2 * ((N_pad if resident else tn) * D_pad * 2)  # u2e (resident/stream)
        u += 2 * (3 * D_pad * D_pad * 2)                   # weight slab
        u += 2 * (D_pad * 4)                               # bias
        u += 2 * (tb * D_pad * 4)                          # output tile (f32)
        u += tb * D_pad * 4                                # f32 accumulator scratch
        return u

    # TODO(synk): pipeline_mode=pl.Buffered(1) on the constant-index blocks
    #             (u2e/w/bias) would halve their reserved VMEM; kept default-
    #             buffered for lowering portability (budget counts 2 buffers).
    u2e_resident = (not force_stream_u2e) and vmem_use(True) <= vmem_cap // 2
    use = vmem_use(u2e_resident)
    if vmem_limit_bytes is None:
        vmem_limit_bytes = min(max(use + (8 << 20), 32 << 20),
                               int(0.9 * vmem_cap))

    # advisory cost estimate
    flops = 2 * B_pad * N_pad * D_pad + 2 * B_pad * (3 * D_pad) * D_pad
    u2e_passes = 1 if u2e_resident else nb
    bytes_accessed = (2 * (adj_p.size + self_p.size + clu_p.size + w_slab.size)
                      + 2 * u2e_passes * u2e_p.size
                      + 4 * (bias.size + B_pad * D_pad))

    if u2e_resident:
        u2e_spec = pl.BlockSpec((N_pad, D_pad), lambda i, k: (0, 0))   # resident
    else:
        u2e_spec = pl.BlockSpec((tn, D_pad), lambda i, k: (k, 0))      # streamed

    kernel = functools.partial(social_encoder_kernel, tn=tn,
                               u2e_resident=u2e_resident)

    out = pl.pallas_call(
        kernel,
        out_shape=jax.ShapeDtypeStruct((B_pad, D_pad), jnp.float32),
        grid_spec=pltpu.PrefetchScalarGridSpec(
            num_scalar_prefetch=0,
            grid=(nb, nk),
            in_specs=[
                pl.BlockSpec((tb, D_pad), lambda i, k: (i, 0)),         # self feats
                pl.BlockSpec((tb, D_pad), lambda i, k: (i, 0)),         # cluster feats
                pl.BlockSpec((tb, tn), lambda i, k: (i, k)),            # adjacency rows
                u2e_spec,                                               # u2e table
                pl.BlockSpec((3 * D_pad, D_pad), lambda i, k: (0, 0)),  # weight slab
                pl.BlockSpec((1, D_pad), lambda i, k: (0, 0)),          # bias
            ],
            out_specs=pl.BlockSpec((tb, D_pad), lambda i, k: (i, 0)),
            scratch_shapes=[pltpu.VMEM((tb, D_pad), jnp.float32)],      # neigh acc
        ),
        compiler_params=pltpu.CompilerParams(
            dimension_semantics=("parallel", "arbitrary"),
            vmem_limit_bytes=int(vmem_limit_bytes),
        ),
        cost_estimate=pl.CostEstimate(flops=int(flops), transcendentals=0,
                                      bytes_accessed=int(bytes_accessed)),
    )(self_p, clu_p, adj_p, u2e_p, w_slab, bias)

    return out[:B, :D]


# ------------------------------ references -----------------------------------

def _reference_f32(nodes, u2e_weight, base_weight, cluster_ids, adj_norm,
                   w_linear, b_linear):
    self_feats = u2e_weight[nodes]
    neigh_feats = adj_norm[nodes] @ u2e_weight
    clu_feats = base_weight[cluster_ids[nodes]]
    combined = jnp.concatenate([self_feats, neigh_feats, clu_feats], axis=1)
    return jax.nn.relu(combined @ w_linear.T + b_linear)


def _reference_bf16(nodes, u2e_weight, base_weight, cluster_ids, adj_norm,
                    w_linear, b_linear):
    """Matches the kernel's precision strategy (bf16 MXU inputs, f32 accum)."""
    bf = jnp.bfloat16
    u2e_bf = u2e_weight.astype(bf)
    self_feats = u2e_bf[nodes]
    neigh = jnp.dot(adj_norm.astype(bf)[nodes], u2e_bf,
                    preferred_element_type=jnp.float32)
    clu = base_weight.astype(bf)[cluster_ids[nodes]]
    feats = jnp.concatenate([self_feats, neigh.astype(bf), clu], axis=1)
    h = jnp.dot(feats, w_linear.T.astype(bf), preferred_element_type=jnp.float32)
    h = h + b_linear
    return jnp.maximum(h, 0.0)


if __name__ == "__main__":
    key = jax.random.PRNGKey(0)
    k1, k2, k3, k4, k5, k6 = jax.random.split(key, 6)

    N_USERS = 300     # number of user embeddings
    N_CLUSTERS = 4    # number of cluster embeddings (base_model)
    D = 32            # embed_dim
    B = 24            # batch of nodes

    # deterministic parameters (shapes from __init__)
    u2e_weight = jax.random.normal(k1, (N_USERS, D), dtype=jnp.float32)
    base_weight = jax.random.normal(k2, (N_CLUSTERS, D), dtype=jnp.float32)
    w_linear = jax.random.normal(k3, (D, 3 * D), dtype=jnp.float32) * 0.1  # nn.Linear(3D, D)
    b_linear = jax.random.normal(k4, (D,), dtype=jnp.float32) * 0.1

    # deterministic social adjacency (self-loop guarantees nonzero degree) + clusters
    adj = (jax.random.uniform(k5, (N_USERS, N_USERS)) < 0.3).astype(jnp.float32)
    adj = jnp.maximum(adj, jnp.eye(N_USERS, dtype=jnp.float32))
    adj_norm = adj / jnp.sum(adj, axis=1, keepdims=True)   # mean aggregator
    cluster_ids = jax.random.randint(k6, (N_USERS,), 0, N_CLUSTERS, dtype=jnp.int32)

    nodes = jnp.arange(B, dtype=jnp.int32)

    # 1) default path: VMEM-resident u2e table, >=2 batch tiles (v7x parallel axis)
    out_resident = social_encoder_forward(nodes, u2e_weight, base_weight,
                                          cluster_ids, adj_norm,
                                          w_linear, b_linear)
    # 2) forced streaming path with small tiles: exercises the neighbor-reduction
    #    accumulation (3 k-steps) and the streamed-u2e BlockSpec
    out_streamed = social_encoder_forward(nodes, u2e_weight, base_weight,
                                          cluster_ids, adj_norm,
                                          w_linear, b_linear,
                                          max_tb=8, max_tn=128,
                                          force_stream_u2e=True)
    out_resident = jax.block_until_ready(out_resident)
    out_streamed = jax.block_until_ready(out_streamed)

    ref_bf = _reference_bf16(nodes, u2e_weight, base_weight, cluster_ids,
                             adj_norm, w_linear, b_linear)
    ref_f32 = _reference_f32(nodes, u2e_weight, base_weight, cluster_ids,
                             adj_norm, w_linear, b_linear)

    for out in (out_resident, out_streamed):
        assert out.shape == (B, D)
        # tight check vs. a reference using the same bf16/f32 precision strategy
        assert jnp.allclose(out, ref_bf, atol=2e-3, rtol=2e-3), \
            float(jnp.max(jnp.abs(out - ref_bf)))
        # loose check vs. the pure-f32 PyTorch-equivalent reference
        assert jnp.allclose(out, ref_f32, atol=6e-2, rtol=6e-2), \
            float(jnp.max(jnp.abs(out - ref_f32)))

    print("KERNEL_OK")
</pallas_src>

<mosaic_0001>
module attributes {stable_mosaic.version = 11 : i64} {
  func.func @social_encoder_kernel(%arg0: i32, %arg1: i32, %arg2: memref<16x128xbf16, #tpu.memory_space<vmem>>, %arg3: memref<16x128xbf16, #tpu.memory_space<vmem>>, %arg4: memref<16x384xbf16, #tpu.memory_space<vmem>>, %arg5: memref<384x128xbf16, #tpu.memory_space<vmem>>, %arg6: memref<384x128xbf16, #tpu.memory_space<vmem>>, %arg7: memref<1x128xf32, #tpu.memory_space<vmem>>, %arg8: memref<16x128xf32, #tpu.memory_space<vmem>>, %arg9: memref<16x128xf32, #tpu.memory_space<vmem>>) attributes {dimension_semantics = [#tpu.dimension_semantics<parallel>, #tpu.dimension_semantics<arbitrary>], iteration_bounds = array<i64: 2, 1>, scalar_prefetch = 0 : i64, scratch_operands = 1 : i64, tpu.core_type = #tpu.core_type<tc>, window_params = [{transform_indices = @transform_0, window_bounds = array<i64: 16, 128>}, {transform_indices = @transform_1, window_bounds = array<i64: 16, 128>}, {transform_indices = @transform_2, window_bounds = array<i64: 16, 384>}, {pipeline_mode = #tpu.pipeline_mode<synchronous>, transform_indices = @transform_3, window_bounds = array<i64: 384, 128>}, {pipeline_mode = #tpu.pipeline_mode<synchronous>, transform_indices = @transform_4, window_bounds = array<i64: 384, 128>}, {pipeline_mode = #tpu.pipeline_mode<synchronous>, transform_indices = @transform_5, window_bounds = array<i64: 1, 128>}, {transform_indices = @transform_6, window_bounds = array<i64: 16, 128>}]} {
    %c0_i32 = arith.constant 0 : i32
    %0 = arith.cmpi eq, %arg1, %c0_i32 : i32
    %1 = arith.extui %0 : i1 to i32
    %c0_i32_0 = arith.constant 0 : i32
    %2 = arith.cmpi ne, %1, %c0_i32_0 : i32
    scf.if %2 {
      %cst_10 = arith.constant 0.000000e+00 : f32
      %12 = vector.broadcast %cst_10 : f32 to vector<16x128xf32>
      %c0_11 = arith.constant 0 : index
      %c0_12 = arith.constant 0 : index
      %13 = vector.load %arg9[%c0_11, %c0_12] : memref<16x128xf32, #tpu.memory_space<vmem>>, vector<16x128xf32>
      tpu.vector_store %arg9[%c0_11, %c0_12], %12 {strides = array<i32>} : memref<16x128xf32, #tpu.memory_space<vmem>>, vector<16x128xf32>,
    } else {
    }
    %c0 = arith.constant 0 : index
    %c0_1 = arith.constant 0 : index
    %3 = vector.load %arg5[%c0, %c0_1] : memref<384x128xbf16, #tpu.memory_space<vmem>>, vector<384x128xbf16>
    %c0_2 = arith.constant 0 : index
    %c0_3 = arith.constant 0 : index
    %4 = vector.load %arg9[%c0_2, %c0_3] : memref<16x128xf32, #tpu.memory_space<vmem>>, vector<16x128xf32>
    %c0_4 = arith.constant 0 : index
    %c0_5 = arith.constant 0 : index
    %5 = vector.load %arg4[%c0_4, %c0_5] : memref<16x384xbf16, #tpu.memory_space<vmem>>, vector<16x384xbf16>
    %cst = arith.constant dense<0.000000e+00> : vector<16x128xf32>
    %6 = tpu.matmul %5, %3, %cst {dimension_numbers = #tpu.dot_dimension_numbers<[1], [0], [0], [1], [0, 0, 1, 1], [], []>} : vector<16x384xbf16>, vector<384x128xbf16>, vector<16x128xf32> -> vector<16x128xf32>
    %7 = arith.addf %4, %6 : vector<16x128xf32>
    %c0_6 = arith.constant 0 : index
    %c0_7 = arith.constant 0 : index
    %8 = vector.load %arg9[%c0_6, %c0_7] : memref<16x128xf32, #tpu.memory_space<vmem>>, vector<16x128xf32>
    tpu.vector_store %arg9[%c0_6, %c0_7], %7 {strides = array<i32>} : memref<16x128xf32, #tpu.memory_space<vmem>>, vector<16x128xf32>,
    %c0_i32_8 = arith.constant 0 : i32
    %9 = arith.cmpi eq, %arg1, %c0_i32_8 : i32
    %10 = arith.extui %9 : i1 to i32
    %c0_i32_9 = arith.constant 0 : i32
    %11 = arith.cmpi ne, %10, %c0_i32_9 : i32
    scf.if %11 {
      %c0_10 = arith.constant 0 : index
      %c0_11 = arith.constant 0 : index
      %12 = vector.load %arg2[%c0_10, %c0_11] : memref<16x128xbf16, #tpu.memory_space<vmem>>, vector<16x128xbf16>
      %c0_12 = arith.constant 0 : index
      %c0_13 = arith.constant 0 : index
      %13 = vector.load %arg9[%c0_12, %c0_13] : memref<16x128xf32, #tpu.memory_space<vmem>>, vector<16x128xf32>
      %14 = arith.truncf %13 : vector<16x128xf32> to vector<16x128xbf16>
      %c0_14 = arith.constant 0 : index
      %c0_15 = arith.constant 0 : index
      %15 = vector.load %arg3[%c0_14, %c0_15] : memref<16x128xbf16, #tpu.memory_space<vmem>>, vector<16x128xbf16>
      %16 = tpu.concatenate %12, %14, %15 in 1 : vector<16x128xbf16>, vector<16x128xbf16>, vector<16x128xbf16> -> vector<16x384xbf16>
      %c0_16 = arith.constant 0 : index
      %c0_17 = arith.constant 0 : index
      %17 = vector.load %arg6[%c0_16, %c0_17] : memref<384x128xbf16, #tpu.memory_space<vmem>>, vector<384x128xbf16>
      %cst_18 = arith.constant dense<0.000000e+00> : vector<16x128xf32>
      %18 = tpu.matmul %16, %17, %cst_18 {dimension_numbers = #tpu.dot_dimension_numbers<[1], [0], [0], [1], [0, 0, 1, 1], [], []>} : vector<16x384xbf16>, vector<384x128xbf16>, vector<16x128xf32> -> vector<16x128xf32>
      %c0_19 = arith.constant 0 : index
      %c0_20 = arith.constant 0 : index
      %19 = vector.load %arg7[%c0_19, %c0_20] : memref<1x128xf32, #tpu.memory_space<vmem>>, vector<1x128xf32>
      %20 = vector.broadcast %19 : vector<1x128xf32> to vector<16x128xf32>
      %21 = arith.addf %18, %20 : vector<16x128xf32>
      %cst_21 = arith.constant 0.000000e+00 : f32
      %22 = vector.broadcast %cst_21 : f32 to vector<16x128xf32>
      %23 = arith.maximumf %21, %22 : vector<16x128xf32>
      %c0_22 = arith.constant 0 : index
      %c0_23 = arith.constant 0 : index
      %24 = vector.load %arg8[%c0_22, %c0_23] : memref<16x128xf32, #tpu.memory_space<vmem>>, vector<16x128xf32>
      tpu.vector_store %arg8[%c0_22, %c0_23], %23 {strides = array<i32>} : memref<16x128xf32, #tpu.memory_space<vmem>>, vector<16x128xf32>,
    } else {
    }
    return
  }
  func.func @transform_0(%arg0: i32, %arg1: i32) -> (i32, i32) {
    %c0_i32 = arith.constant 0 : i32
    %c0_i32_0 = arith.constant 0 : i32
    return %arg0, %c0_i32 : i32, i32
  }
  func.func @transform_1(%arg0: i32, %arg1: i32) -> (i32, i32) {
    %c0_i32 = arith.constant 0 : i32
    %c0_i32_0 = arith.constant 0 : i32
    return %arg0, %c0_i32 : i32, i32
  }
  func.func @transform_2(%arg0: i32, %arg1: i32) -> (i32, i32) {
    %c0_i32 = arith.constant 0 : i32
    return %arg0, %arg1 : i32, i32
  }
  func.func @transform_3(%arg0: i32, %arg1: i32) -> (i32, i32) {
    %c0_i32 = arith.constant 0 : i32
    %c0_i32_0 = arith.constant 0 : i32
    %c0_i32_1 = arith.constant 0 : i32
    return %c0_i32, %c0_i32_0 : i32, i32
  }
  func.func @transform_4(%arg0: i32, %arg1: i32) -> (i32, i32) {
    %c0_i32 = arith.constant 0 : i32
    %c0_i32_0 = arith.constant 0 : i32
    %c0_i32_1 = arith.constant 0 : i32
    return %c0_i32, %c0_i32_0 : i32, i32
  }
  func.func @transform_5(%arg0: i32, %arg1: i32) -> (i32, i32) {
    %c0_i32 = arith.constant 0 : i32
    %c0_i32_0 = arith.constant 0 : i32
    %c0_i32_1 = arith.constant 0 : i32
    return %c0_i32, %c0_i32_0 : i32, i32
  }
  func.func @transform_6(%arg0: i32, %arg1: i32) -> (i32, i32) {
    %c0_i32 = arith.constant 0 : i32
    %c0_i32_0 = arith.constant 0 : i32
    return %arg0, %c0_i32 : i32, i32
  }
}

</mosaic_0001>

<llo_original>
// kernel: tpu_custom_call.1
$region0: #{tpu_custom_call.1}
  #allocation0 [shape = 'u32[]', space=smem, size = 0x4, offset = 0x4, fixed_abs, tag = 'smem constant byte address 0x4 - core index']
  #allocation1 [shape = 'u32[144,128]{1,0:T(1,128)}', space=vmem, size = 0x12000, scoped, tag = 'internal scratch']
  #allocation2 [shape = 'f32[16,128]{1,0:T(8,128)}', space=vmem, size = 0x2000, scoped, tag = 'scratch operand']
  %s0 = inlined_call_operand.hbm [shape: bf16[32,128], index: 0, kind: input, shape index: {}]
  %s1 = inlined_call_operand.hbm [shape: bf16[32,128], index: 1, kind: input, shape index: {}]
  %s2 = inlined_call_operand.hbm [shape: bf16[32,384], index: 2, kind: input, shape index: {}]
  %s3 = inlined_call_operand.hbm [shape: bf16[384,128], index: 3, kind: input, shape index: {}]
  %s4 = inlined_call_operand.hbm [shape: bf16[384,128], index: 4, kind: input, shape index: {}]
  %s5 = inlined_call_operand.vmem [shape: f32[1,128], index: 5, kind: input, shape index: {}]
  %s6 = inlined_call_operand.hbm [shape: f32[32,128], index: 6, kind: output, shape index: {}]
  %s7 = sld [smem:[#allocation0]]
  $region85: #{tpu_custom_call.1} parent=0
    _
  %s9 = ssub.s32 1, %s7
  %s10 = scalar_select 0, %s9, %s7
  $region1: #{tpu_custom_call.1} parent=0
    #allocation3 [shape = 'u8[8192]{0}', space=vmem, size = 0x2000, scoped, tag = 'input window, operand 0']
    #allocation4 [shape = 's32[2]{0}', space=sflag, size = 0x8, scoped, tag = 'scoped memory for tpu_custom_call.1']
    #allocation5 [shape = 's32[2]{0}', space=sflag, size = 0x8, scoped, tag = 'scoped memory for tpu_custom_call.1']
    #allocation6 [shape = 'u8[8192]{0}', space=vmem, size = 0x2000, scoped, tag = 'input window, operand 1']
    #allocation7 [shape = 's32[2]{0}', space=sflag, size = 0x8, scoped, tag = 'scoped memory for tpu_custom_call.1']
    #allocation8 [shape = 'u8[24576]{0}', space=vmem, size = 0x6000, scoped, tag = 'input window, operand 2']
    #allocation9 [shape = 'u8[98304]{0}', space=vmem, size = 0x18000, scoped, tag = 'input window, operand 3, single buffered']
    #allocation10 [shape = 's32[1]{0}', space=sflag, size = 0x4, scoped, tag = 'scoped memory for tpu_custom_call.1']
    #allocation11 [shape = 'u8[98304]{0}', space=vmem, size = 0x18000, scoped, tag = 'input window, operand 4, single buffered']
    #allocation12 [shape = 'u8[16384]{0}', space=vmem, size = 0x4000, scoped, tag = 'output window, operand 0']
    %11 = vsyncpa [#allocation4], 0
    %s12 = scalar_lea.sflag [#allocation4], 1
    %13 = vsyncpa %s12, 0
    %14 = vsyncpa [#allocation7], 0
    %s15 = scalar_lea.sflag [#allocation7], 1
    %16 = vsyncpa %s15, 0
    %17 = vsyncpa [#allocation10], 0
    %18 = vsyncpa [#allocation5], 0
    %s19 = scalar_lea.sflag [#allocation5], 1
    %20 = vsyncpa %s19, 0
    loop: start=0, step=1, limit=4
    $region2: #{tpu_custom_call.1} parent=1 // loop_pre_header
      _
    $region3: #{tpu_custom_call.1} parent=1 // loop_header
      %s22 = sphi 0, %s26
      %p23 = scmp.ge.s32.totalorder %s22, 4
      %s29 = sphi 0, %s41
      %s30 = sphi 0, %s37
      %s31 = sphi 0, %s29
      %s32 = sphi 0, %s30
      %s33 = sphi 0, %s31
      %s34 = sphi 0, %s32
      %s44 = sphi 0, %s46
      %s47 = sphi 0, %s44
      %s48 = sphi 0, %s47
      %s64 = sphi 0, %s48
      %s70 = sphi 0, %s72
      %s73 = sphi 0, %s70
      %s74 = sphi 0, %s73
      %s90 = sphi 0, %s74
      %s98 = sphi 0, %s100
      %s101 = sphi 0, %s98
      %s102 = sphi 0, %s101
      %s118 = sphi 0, %s102
      %s122 = sphi 0, %s122
      %s124 = sphi 0, %s122
      %s125 = sphi 0, %s124
      %s139 = sphi 0, %s125
      %s143 = sphi 0, %s143
      %s145 = sphi 0, %s143
      %s146 = sphi 0, %s145
      %s160 = sphi 0, %s146
      %s164 = sphi 0, %s164
      %s166 = sphi 0, %s164
      %s167 = sphi 0, %s166
      %s181 = sphi 0, %s167
      %s187 = sphi 0, %s189
      %s190 = sphi 0, %s187
      %s191 = sphi 0, %s190
      %s207 = sphi 0, %s191
    $region4: #{tpu_custom_call.1} parent=1 // loop_header_branch
      %25 = sbr.rel (%p23) target = $region8
    $region5: #{tpu_custom_call.1} parent=1 // loop_body
      %s27 = ssub.s32 %s22, 1
      %s28 = ssub.s32 %s22, 2
      %s35 = sadd.s32 1, %s30
      %p36 = scmp.ge.s32.totalorder %s35, 1
      %s37 = scalar_select %p36, 0, %s35
      %s38 = sadd.s32 1, %s29
      %s39 = scalar_select %p36, %s38, %s29
      %p40 = scmp.ge.s32.totalorder %s39, 2
      %s41 = scalar_select %p40, 0, %s39
      %s42 = ssub.s32 %s29, %s41
      %p43 = scmp.eq.s32.totalorder %s42, 0
      %s45 = sadd.s32 %s44, 1
      %s46 = scalar_select %p43, %s44, %s45
      %p49 = pneg %p43
      %p50 = scmp.eq.s32.totalorder %s22, 1
      %p51 = por %p49, %p50
      %p52 = scmp.ne.s32.totalorder %s44, %s47
      %p53 = scmp.eq.s32.totalorder %s22, 0
      %p54 = por %p52, %p53
      %p55 = scmp.ne.s32.totalorder %s44, %s47
      %p56 = scmp.eq.s32.totalorder %s27, 1
      %p57 = por %p55, %p56
      %p58 = scmp.ne.s32.totalorder %s47, %s48
      %p59 = scmp.eq.s32.totalorder %s27, 0
      %p60 = por %p58, %p59
      %p61 = scmp.ne.s32.totalorder %s47, %s48
      %p62 = scmp.eq.s32.totalorder %s28, 1
      %p63 = por %p61, %p62
      %p65 = scmp.ne.s32.totalorder %s48, %s64
      %p66 = scmp.eq.s32.totalorder %s28, 0
      %p67 = por %p65, %p66
      %s68 = ssub.s32 %s29, %s41
      %p69 = scmp.eq.s32.totalorder %s68, 0
      %s71 = sadd.s32 %s70, 1
      %s72 = scalar_select %p69, %s70, %s71
      %p75 = pneg %p69
      %p76 = scmp.eq.s32.totalorder %s22, 1
      %p77 = por %p75, %p76
      %p78 = scmp.ne.s32.totalorder %s70, %s73
      %p79 = scmp.eq.s32.totalorder %s22, 0
      %p80 = por %p78, %p79
      %p81 = scmp.ne.s32.totalorder %s70, %s73
      %p82 = scmp.eq.s32.totalorder %s27, 1
      %p83 = por %p81, %p82
      %p84 = scmp.ne.s32.totalorder %s73, %s74
      %p85 = scmp.eq.s32.totalorder %s27, 0
      %p86 = por %p84, %p85
      %p87 = scmp.ne.s32.totalorder %s73, %s74
      %p88 = scmp.eq.s32.totalorder %s28, 1
      %p89 = por %p87, %p88
      %p91 = scmp.ne.s32.totalorder %s74, %s90
      %p92 = scmp.eq.s32.totalorder %s28, 0
      %p93 = por %p91, %p92
      %s94 = ssub.s32 %s29, %s41
      %s95 = ssub.s32 %s30, %s37
      %s96 = sor.u32 %s94, %s95
      %p97 = scmp.eq.s32.totalorder %s96, 0
      %s99 = sadd.s32 %s98, 1
      %s100 = scalar_select %p97, %s98, %s99
      %p103 = pneg %p97
      %p104 = scmp.eq.s32.totalorder %s22, 1
      %p105 = por %p103, %p104
      %p106 = scmp.ne.s32.totalorder %s98, %s101
      %p107 = scmp.eq.s32.totalorder %s22, 0
      %p108 = por %p106, %p107
      %p109 = scmp.ne.s32.totalorder %s98, %s101
      %p110 = scmp.eq.s32.totalorder %s27, 1
      %p111 = por %p109, %p110
      %p112 = scmp.ne.s32.totalorder %s101, %s102
      %p113 = scmp.eq.s32.totalorder %s27, 0
      %p114 = por %p112, %p113
      %p115 = scmp.ne.s32.totalorder %s101, %s102
      %p116 = scmp.eq.s32.totalorder %s28, 1
      %p117 = por %p115, %p116
      %p119 = scmp.ne.s32.totalorder %s102, %s118
      %p120 = scmp.eq.s32.totalorder %s28, 0
      %p121 = por %p119, %p120
      %s123 = sadd.s32 %s122, 1
      %p126 = scmp.eq.s32.totalorder %s22, 1
      %p127 = scmp.ne.s32.totalorder %s122, %s124
      %p128 = scmp.eq.s32.totalorder %s22, 0
      %p129 = por %p127, %p128
      %p130 = scmp.ne.s32.totalorder %s122, %s124
      %p131 = scmp.eq.s32.totalorder %s27, 1
      %p132 = por %p130, %p131
      %p133 = scmp.ne.s32.totalorder %s124, %s125
      %p134 = scmp.eq.s32.totalorder %s27, 0
      %p135 = por %p133, %p134
      %p136 = scmp.ne.s32.totalorder %s124, %s125
      %p137 = scmp.eq.s32.totalorder %s28, 1
      %p138 = por %p136, %p137
      %p140 = scmp.ne.s32.totalorder %s125, %s139
      %p141 = scmp.eq.s32.totalorder %s28, 0
      %p142 = por %p140, %p141
      %s144 = sadd.s32 %s143, 1
      %p147 = scmp.eq.s32.totalorder %s22, 1
      %p148 = scmp.ne.s32.totalorder %s143, %s145
      %p149 = scmp.eq.s32.totalorder %s22, 0
      %p150 = por %p148, %p149
      %p151 = scmp.ne.s32.totalorder %s143, %s145
      %p152 = scmp.eq.s32.totalorder %s27, 1
      %p153 = por %p151, %p152
      %p154 = scmp.ne.s32.totalorder %s145, %s146
      %p155 = scmp.eq.s32.totalorder %s27, 0
      %p156 = por %p154, %p155
      %p157 = scmp.ne.s32.totalorder %s145, %s146
      %p158 = scmp.eq.s32.totalorder %s28, 1
      %p159 = por %p157, %p158
      %p161 = scmp.ne.s32.totalorder %s146, %s160
      %p162 = scmp.eq.s32.totalorder %s28, 0
      %p163 = por %p161, %p162
      %s165 = sadd.s32 %s164, 1
      %p168 = scmp.eq.s32.totalorder %s22, 1
      %p169 = scmp.ne.s32.totalorder %s164, %s166
      %p170 = scmp.eq.s32.totalorder %s22, 0
      %p171 = por %p169, %p170
      %p172 = scmp.ne.s32.totalorder %s164, %s166
      %p173 = scmp.eq.s32.totalorder %s27, 1
      %p174 = por %p172, %p173
      %p175 = scmp.ne.s32.totalorder %s166, %s167
      %p176 = scmp.eq.s32.totalorder %s27, 0
      %p177 = por %p175, %p176
      %p178 = scmp.ne.s32.totalorder %s166, %s167
      %p179 = scmp.eq.s32.totalorder %s28, 1
      %p180 = por %p178, %p179
      %p182 = scmp.ne.s32.totalorder %s167, %s181
      %p183 = scmp.eq.s32.totalorder %s28, 0
      %p184 = por %p182, %p183
      %s185 = ssub.s32 %s29, %s41
      %p186 = scmp.eq.s32.totalorder %s185, 0
      %s188 = sadd.s32 %s187, 1
      %s189 = scalar_select %p186, %s187, %s188
      %p192 = pneg %p186
      %p193 = scmp.eq.s32.totalorder %s22, 1
      %p194 = por %p192, %p193
      %p195 = scmp.ne.s32.totalorder %s187, %s190
      %p196 = scmp.eq.s32.totalorder %s22, 0
      %p197 = por %p195, %p196
      %p198 = scmp.ne.s32.totalorder %s187, %s190
      %p199 = scmp.eq.s32.totalorder %s27, 1
      %p200 = por %p198, %p199
      %p201 = scmp.ne.s32.totalorder %s190, %s191
      %p202 = scmp.eq.s32.totalorder %s27, 0
      %p203 = por %p201, %p202
      %p204 = scmp.ne.s32.totalorder %s190, %s191
      %p205 = scmp.eq.s32.totalorder %s28, 1
      %p206 = por %p204, %p205
      %p208 = scmp.ne.s32.totalorder %s191, %s207
      %p209 = scmp.eq.s32.totalorder %s28, 0
      %p210 = por %p208, %p209
      %p211 = scmp.le.s32.totalorder 1, %s22
      %p212 = scmp.lt.s32.totalorder %s22, 3
      %p213 = pnand %p211, %p212
      %p214 = pneg %p213
      // Predicated region
      $region9: #{tpu_custom_call.1} parent=5 // pred_check
        _
      $region10: #{tpu_custom_call.1} parent=5 // pred_check_branch
        %216 = sbr.rel (%p213) target = $region12
      $region11: #{tpu_custom_call.1} parent=5 // pred_region
        %s217 = ssub.s32 %s22, 1
        // Predicated region
        $region13: #{tpu_custom_call.1} parent=11 // pred_check
          %p218 = pneg %p135
        $region14: #{tpu_custom_call.1} parent=11 // pred_check_branch
          %220 = sbr.rel (%p218) target = $region16
        $region15: #{tpu_custom_call.1} parent=11 // pred_region
          %s222 = ssub.s32 3072, 3072
          %223 = vsyncadd [#allocation10], %s222
          %s224 = sshll.u32 [#allocation9], 4
          %s225 = int_to_ptr.vmem [resolvable:$true] %s224
          %230 = dma.hbm_to_vmem [thread:$0]  %s3, 3072, %s225, [#allocation10], 64, 64, 4
        $region16: #{tpu_custom_call.1} parent=11 // pred_fallthru
          _
        // Predicated region
        $region17: #{tpu_custom_call.1} parent=11 // pred_check
          %p231 = pneg %p156
        $region18: #{tpu_custom_call.1} parent=11 // pred_check_branch
          %233 = sbr.rel (%p231) target = $region20
        $region19: #{tpu_custom_call.1} parent=11 // pred_region
          %s235 = ssub.s32 3072, 3072
          %236 = vsyncadd [#allocation10], %s235
          %s237 = sshll.u32 [#allocation11], 4
          %s238 = int_to_ptr.vmem [resolvable:$true] %s237
          %243 = dma.hbm_to_vmem [thread:$0]  %s4, 3072, %s238, [#allocation10], 64, 64, 4
        $region20: #{tpu_custom_call.1} parent=11 // pred_fallthru
          _
        // Predicated region
        $region21: #{tpu_custom_call.1} parent=11 // pred_check
          %p244 = pneg %p177
        $region22: #{tpu_custom_call.1} parent=11 // pred_check_branch
          %246 = sbr.rel (%p244) target = $region24
        $region23: #{tpu_custom_call.1} parent=11 // pred_region
          _
        $region24: #{tpu_custom_call.1} parent=11 // pred_fallthru
          _
      $region12: #{tpu_custom_call.1} parent=5 // pred_fallthru
        _
      %p247 = scmp.lt.s32.totalorder %s22, 2
      // Predicated region
      $region25: #{tpu_custom_call.1} parent=5 // pred_check
        %p248 = pneg %p247
      $region26: #{tpu_custom_call.1} parent=5 // pred_check_branch
        %250 = sbr.rel (%p248) target = $region28
      $region27: #{tpu_custom_call.1} parent=5 // pred_region
        // Predicated region
        $region29: #{tpu_custom_call.1} parent=27 // pred_check
          %p251 = pneg %p54
        $region30: #{tpu_custom_call.1} parent=27 // pred_check_branch
          %253 = sbr.rel (%p251) target = $region32
        $region31: #{tpu_custom_call.1} parent=27 // pred_region
          %s254 = sand.u32 %s44, 1
          %s255 = scalar_lea.sflag [#allocation4], %s254
          %s256 = sand.u32 %s44, 1
          %s257 = smul.addr %s256, 8
          %s258 = scalar_lea.vmem [#allocation3], %s257
          %s259 = smul.u32 2, %s29
          %s261 = ssub.s32 128, 128
          %262 = vsyncadd %s255, %s261
          %s263 = smul.addr %s259, 64
          %s264 = scalar_lea.hbm %s0, %s263
          %s265 = sshll.u32 %s258, 4
          %s266 = int_to_ptr.vmem [resolvable:$true] %s265
          %271 = dma.hbm_to_vmem [thread:$0]  %s264, 128, %s266, %s255, 64, 64, 4
        $region32: #{tpu_custom_call.1} parent=27 // pred_fallthru
          _
        // Predicated region
        $region33: #{tpu_custom_call.1} parent=27 // pred_check
          %p272 = pneg %p80
        $region34: #{tpu_custom_call.1} parent=27 // pred_check_branch
          %274 = sbr.rel (%p272) target = $region36
        $region35: #{tpu_custom_call.1} parent=27 // pred_region
          %s275 = sand.u32 %s22, 1
          %s276 = scalar_lea.sflag [#allocation7], %s275
          %s277 = sand.u32 %s70, 1
          %s278 = smul.addr %s277, 8
          %s279 = scalar_lea.vmem [#allocation6], %s278
          %s280 = smul.u32 2, %s29
          %s282 = ssub.s32 128, 128
          %283 = vsyncadd %s276, %s282
          %s284 = smul.addr %s280, 64
          %s285 = scalar_lea.hbm %s1, %s284
          %s286 = sshll.u32 %s279, 4
          %s287 = int_to_ptr.vmem [resolvable:$true] %s286
          %292 = dma.hbm_to_vmem [thread:$0]  %s285, 128, %s287, %s276, 64, 64, 4
        $region36: #{tpu_custom_call.1} parent=27 // pred_fallthru
          _
        // Predicated region
        $region37: #{tpu_custom_call.1} parent=27 // pred_check
          %p293 = pneg %p108
        $region38: #{tpu_custom_call.1} parent=27 // pred_check_branch
          %295 = sbr.rel (%p293) target = $region40
        $region39: #{tpu_custom_call.1} parent=27 // pred_region
          %s296 = sand.u32 %s22, 1
          %s297 = scalar_lea.sflag [#allocation7], %s296
          %s298 = sand.u32 %s98, 1
          %s299 = smul.addr %s298, 24
          %s300 = scalar_lea.vmem [#allocation8], %s299
          %s301 = smul.u32 2, %s29
          %s302 = smul.u32 3, %s30
          %s304 = ssub.s32 384, 384
          %305 = vsyncadd %s297, %s304
          %s306 = smul.addr %s301, 3
          %s307 = sadd.s32 %s302, %s306
          %s308 = smul.addr %s307, 64
          %s309 = scalar_lea.hbm %s2, %s308
          %s310 = sshll.u32 %s300, 4
          %s311 = int_to_ptr.vmem [resolvable:$true] %s310
          %316 = dma.hbm_to_vmem [thread:$0]  %s309, 384, %s311, %s297, 192, 192, 12
        $region40: #{tpu_custom_call.1} parent=27 // pred_fallthru
          _
      $region28: #{tpu_custom_call.1} parent=5 // pred_fallthru
        _
      %p317 = scmp.le.s32.totalorder 1, %s22
      %p318 = scmp.lt.s32.totalorder %s22, 3
      %p319 = pnand %p317, %p318
      %p320 = pneg %p319
      // Predicated region
      $region41: #{tpu_custom_call.1} parent=5 // pred_check
        _
      $region42: #{tpu_custom_call.1} parent=5 // pred_check_branch
        %322 = sbr.rel (%p319) target = $region44
      $region43: #{tpu_custom_call.1} parent=5 // pred_region
        %s323 = ssub.s32 %s22, 1
        %s324 = sand.u32 %s47, 1
        %s325 = scalar_lea.sflag [#allocation4], %s324
        %s326 = sand.u32 %s47, 1
        %s327 = smul.addr %s326, 8
        %s328 = scalar_lea.vmem [#allocation3], %s327
        // Predicated region
        $region45: #{tpu_custom_call.1} parent=43 // pred_check
          %p329 = pneg %p60
        $region46: #{tpu_custom_call.1} parent=43 // pred_check_branch
          %331 = sbr.rel (%p329) target = $region48
        $region47: #{tpu_custom_call.1} parent=43 // pred_region
          %332 = dma.done %s325, 128
        $region48: #{tpu_custom_call.1} parent=43 // pred_fallthru
          _
        %s333 = sand.u32 %s27, 1
        %s334 = scalar_lea.sflag [#allocation7], %s333
        %s335 = sand.u32 %s73, 1
        %s336 = smul.addr %s335, 8
        %s337 = scalar_lea.vmem [#allocation6], %s336
        // Predicated region
        $region49: #{tpu_custom_call.1} parent=43 // pred_check
          %p338 = pneg %p86
        $region50: #{tpu_custom_call.1} parent=43 // pred_check_branch
          %340 = sbr.rel (%p338) target = $region52
        $region51: #{tpu_custom_call.1} parent=43 // pred_region
          %341 = dma.done %s334, 128
        $region52: #{tpu_custom_call.1} parent=43 // pred_fallthru
          _
        %s342 = sand.u32 %s27, 1
        %s343 = scalar_lea.sflag [#allocation7], %s342
        %s344 = sand.u32 %s101, 1
        %s345 = smul.addr %s344, 24
        %s346 = scalar_lea.vmem [#allocation8], %s345
        // Predicated region
        $region53: #{tpu_custom_call.1} parent=43 // pred_check
          %p347 = pneg %p114
        $region54: #{tpu_custom_call.1} parent=43 // pred_check_branch
          %349 = sbr.rel (%p347) target = $region56
        $region55: #{tpu_custom_call.1} parent=43 // pred_region
          %350 = dma.done %s343, 384
        $region56: #{tpu_custom_call.1} parent=43 // pred_fallthru
          _
        // Predicated region
        $region57: #{tpu_custom_call.1} parent=43 // pred_check
          %p351 = pneg %p135
        $region58: #{tpu_custom_call.1} parent=43 // pred_check_branch
          %353 = sbr.rel (%p351) target = $region60
        $region59: #{tpu_custom_call.1} parent=43 // pred_region
          %354 = dma.done [#allocation10], 3072
        $region60: #{tpu_custom_call.1} parent=43 // pred_fallthru
          _
        // Predicated region
        $region61: #{tpu_custom_call.1} parent=43 // pred_check
          %p355 = pneg %p156
        $region62: #{tpu_custom_call.1} parent=43 // pred_check_branch
          %357 = sbr.rel (%p355) target = $region64
        $region63: #{tpu_custom_call.1} parent=43 // pred_region
          %358 = dma.done [#allocation10], 3072
        $region64: #{tpu_custom_call.1} parent=43 // pred_fallthru
          _
        %s359 = sand.u32 %s47, 1
        %s360 = scalar_lea.sflag [#allocation4], %s359
        %s361 = sand.u32 %s47, 1
        %s362 = smul.addr %s361, 8
        %s363 = scalar_lea.vmem [#allocation3], %s362
        %p364 = pneg %p60
        %p365 = pneg %p57
        %s366 = sand.u32 %s27, 1
        %s367 = scalar_lea.sflag [#allocation7], %s366
        %s368 = sand.u32 %s73, 1
        %s369 = smul.addr %s368, 8
        %s370 = scalar_lea.vmem [#allocation6], %s369
        %p371 = pneg %p86
        %p372 = pneg %p83
        %s373 = sand.u32 %s27, 1
        %s374 = scalar_lea.sflag [#allocation7], %s373
        %s375 = sand.u32 %s101, 1
        %s376 = smul.addr %s375, 24
        %s377 = scalar_lea.vmem [#allocation8], %s376
        %p378 = pneg %p114
        %p379 = pneg %p111
        %p380 = pneg %p135
        %p381 = pneg %p132
        %p382 = pneg %p156
        %p383 = pneg %p153
        %p384 = pneg %p177
        %p385 = pneg %p174
        %p386 = pneg %p203
        %p387 = pneg %p200
        %s388 = sand.u32 %s190, 1
        %s389 = scalar_lea.sflag [#allocation5], %s388
        %s390 = sand.u32 %s190, 1
        %s391 = smul.addr %s390, 16
        %s392 = scalar_lea.vmem [#allocation12], %s391
        %s393 = smul.u32 2, %s31
        %s394 = smul.u32 2, %s31
        %s395 = smul.u32 2, %s31
        %s396 = smul.u32 3, %s32
        %s397 = smul.u32 2, %s31
        %p399 = scmp.eq.s32.totalorder %s32, 0
        // Predicated region
        $region65: #{tpu_custom_call.1} parent=43 // pred_check
          %p400 = pneg %p399
        $region66: #{tpu_custom_call.1} parent=43 // pred_check_branch
          %402 = sbr.rel (%p400) target = $region68
        $region67: #{tpu_custom_call.1} parent=43 // pred_region
          %403 = vst [vmem:[#allocation2] sm:$0xff] 0.0
          %404 = vst [vmem:[#allocation2 + $0x8] sm:$0xff] 0.0
        $region68: #{tpu_custom_call.1} parent=43 // pred_fallthru
          _
        %v405 = vld [vmem:[#allocation9] sm:$0xf]
        %v406 = vld [vmem:[#allocation9 + $0x4] sm:$0xf]
        %v407 = vld [vmem:[#allocation9 + $0x8] sm:$0xf]
        %v408 = vld [vmem:[#allocation9 + $0xc] sm:$0xf]
        %v409 = vld [vmem:[#allocation9 + $0x10] sm:$0xf]
        %v410 = vld [vmem:[#allocation9 + $0x14] sm:$0xf]
        %v411 = vld [vmem:[#allocation9 + $0x18] sm:$0xf]
        %v412 = vld [vmem:[#allocation9 + $0x1c] sm:$0xf]
        %v413 = vld [vmem:[#allocation9 + $0x20] sm:$0xf]
        %v414 = vld [vmem:[#allocation9 + $0x24] sm:$0xf]
        %v415 = vld [vmem:[#allocation9 + $0x28] sm:$0xf]
        %v416 = vld [vmem:[#allocation9 + $0x2c] sm:$0xf]
        %v417 = vld [vmem:[#allocation9 + $0x30] sm:$0xf]
        %v418 = vld [vmem:[#allocation9 + $0x34] sm:$0xf]
        %v419 = vld [vmem:[#allocation9 + $0x38] sm:$0xf]
        %v420 = vld [vmem:[#allocation9 + $0x3c] sm:$0xf]
        %v421 = vld [vmem:[#allocation9 + $0x40] sm:$0xf]
        %v422 = vld [vmem:[#allocation9 + $0x44] sm:$0xf]
        %v423 = vld [vmem:[#allocation9 + $0x48] sm:$0xf]
        %v424 = vld [vmem:[#allocation9 + $0x4c] sm:$0xf]
        %v425 = vld [vmem:[#allocation9 + $0x50] sm:$0xf]
        %v426 = vld [vmem:[#allocation9 + $0x54] sm:$0xf]
        %v427 = vld [vmem:[#allocation9 + $0x58] sm:$0xf]
        %v428 = vld [vmem:[#allocation9 + $0x5c] sm:$0xf]
        %v429 = vld [vmem:[#allocation9 + $0x60] sm:$0xf]
        %v430 = vld [vmem:[#allocation9 + $0x64] sm:$0xf]
        %v431 = vld [vmem:[#allocation9 + $0x68] sm:$0xf]
        %v432 = vld [vmem:[#allocation9 + $0x6c] sm:$0xf]
        %v433 = vld [vmem:[#allocation9 + $0x70] sm:$0xf]
        %v434 = vld [vmem:[#allocation9 + $0x74] sm:$0xf]
        %v435 = vld [vmem:[#allocation9 + $0x78] sm:$0xf]
        %v436 = vld [vmem:[#allocation9 + $0x7c] sm:$0xf]
        %v437 = vld [vmem:[#allocation9 + $0x80] sm:$0xf]
        %v438 = vld [vmem:[#allocation9 + $0x84] sm:$0xf]
        %v439 = vld [vmem:[#allocation9 + $0x88] sm:$0xf]
        %v440 = vld [vmem:[#allocation9 + $0x8c] sm:$0xf]
        %v441 = vld [vmem:[#allocation9 + $0x90] sm:$0xf]
        %v442 = vld [vmem:[#allocation9 + $0x94] sm:$0xf]
        %v443 = vld [vmem:[#allocation9 + $0x98] sm:$0xf]
        %v444 = vld [vmem:[#allocation9 + $0x9c] sm:$0xf]
        %v445 = vld [vmem:[#allocation9 + $0xa0] sm:$0xf]
        %v446 = vld [vmem:[#allocation9 + $0xa4] sm:$0xf]
        %v447 = vld [vmem:[#allocation9 + $0xa8] sm:$0xf]
        %v448 = vld [vmem:[#allocation9 + $0xac] sm:$0xf]
        %v449 = vld [vmem:[#allocation9 + $0xb0] sm:$0xf]
        %v450 = vld [vmem:[#allocation9 + $0xb4] sm:$0xf]
        %v451 = vld [vmem:[#allocation9 + $0xb8] sm:$0xf]
        %v452 = vld [vmem:[#allocation9 + $0xbc] sm:$0xf]
        %v453 = vld [vmem:[#allocation2] sm:$0xff]
        %v454 = vld [vmem:[#allocation2 + $0x8] sm:$0xff]
        %v455 = vld [vmem:[%s346] sm:$0xff]
        %v456 = vld [vmem:[%s346 + $0x8] sm:$0xf]
        %v457 = vld [vmem:[%s346 + $0xc] sm:$0xff]
        %v458 = vld [vmem:[%s346 + $0x14] sm:$0xf]
        %v463 = vunpack.c.l.b16 %v455
        %v464 = vunpack.c.h.b16 %v455
        %v465 = vunpack.c.l.b16 %v456
        %v466 = vunpack.c.l.b16 %v457
        %v467 = vunpack.c.h.b16 %v457
        %v468 = vunpack.c.l.b16 %v458
        %v469 = vpack.c.b16 %v466, %v463
        %v470 = vpack.c.b16 %v467, %v464
        %v471 = vpack.c.b16 %v468, %v465
        %v523 = vunpack.c.l.b16 %v405
        %v524 = vunpack.c.l.b16 %v406
        %v525 = vunpack.c.l.b16 %v407
        %v526 = vunpack.c.l.b16 %v408
        %v527 = vunpack.c.l.b16 %v409
        %v528 = vunpack.c.l.b16 %v410
        %v529 = vunpack.c.l.b16 %v411
        %v530 = vunpack.c.l.b16 %v412
        %v531 = vunpack.c.l.b16 %v413
        %v532 = vunpack.c.l.b16 %v414
        %v533 = vunpack.c.l.b16 %v415
        %v534 = vunpack.c.l.b16 %v416
        %v535 = vunpack.c.l.b16 %v417
        %v536 = vunpack.c.l.b16 %v418
        %v537 = vunpack.c.l.b16 %v419
        %v538 = vunpack.c.l.b16 %v420
        %v539 = vunpack.c.l.b16 %v421
        %v540 = vunpack.c.l.b16 %v422
        %v541 = vunpack.c.l.b16 %v423
        %v542 = vunpack.c.l.b16 %v424
        %v543 = vunpack.c.l.b16 %v425
        %v544 = vunpack.c.l.b16 %v426
        %v545 = vunpack.c.l.b16 %v427
        %v546 = vunpack.c.l.b16 %v428
        %v547 = vunpack.c.l.b16 %v429
        %v548 = vunpack.c.l.b16 %v430
        %v549 = vunpack.c.l.b16 %v431
        %v550 = vunpack.c.l.b16 %v432
        %v551 = vunpack.c.l.b16 %v433
        %v552 = vunpack.c.l.b16 %v434
        %v553 = vunpack.c.l.b16 %v435
        %v554 = vunpack.c.l.b16 %v436
        %v555 = vunpack.c.l.b16 %v437
        %v556 = vunpack.c.l.b16 %v438
        %v557 = vunpack.c.l.b16 %v439
        %v558 = vunpack.c.l.b16 %v440
        %v559 = vunpack.c.l.b16 %v441
        %v560 = vunpack.c.l.b16 %v442
        %v561 = vunpack.c.l.b16 %v443
        %v562 = vunpack.c.l.b16 %v444
        %v563 = vunpack.c.l.b16 %v445
        %v564 = vunpack.c.l.b16 %v446
        %v565 = vunpack.c.l.b16 %v447
        %v566 = vunpack.c.l.b16 %v448
        %v567 = vunpack.c.l.b16 %v449
        %v568 = vunpack.c.l.b16 %v450
        %v569 = vunpack.c.l.b16 %v451
        %v570 = vunpack.c.l.b16 %v452
        %v571 = vpack.c.b16 %v524, %v523
        %v572 = vpack.c.b16 %v526, %v525
        %v573 = vpack.c.b16 %v528, %v527
        %v574 = vpack.c.b16 %v530, %v529
        %v575 = vpack.c.b16 %v532, %v531
        %v576 = vpack.c.b16 %v534, %v533
        %v577 = vpack.c.b16 %v536, %v535
        %v578 = vpack.c.b16 %v538, %v537
        %v579 = vpack.c.b16 %v540, %v539
        %v580 = vpack.c.b16 %v542, %v541
        %v581 = vpack.c.b16 %v544, %v543
        %v582 = vpack.c.b16 %v546, %v545
        %v583 = vpack.c.b16 %v548, %v547
        %v584 = vpack.c.b16 %v550, %v549
        %v585 = vpack.c.b16 %v552, %v551
        %v586 = vpack.c.b16 %v554, %v553
        %v587 = vpack.c.b16 %v556, %v555
        %v588 = vpack.c.b16 %v558, %v557
        %v589 = vpack.c.b16 %v560, %v559
        %v590 = vpack.c.b16 %v562, %v561
        %v591 = vpack.c.b16 %v564, %v563
        %v592 = vpack.c.b16 %v566, %v565
        %v593 = vpack.c.b16 %v568, %v567
        %v594 = vpack.c.b16 %v570, %v569
        %619 = vmatprep.subr.bf16.mxu0 0
        %620 = vmatpush1.bf16.msra.mxu0 %v578
        %621 = vmatprep.subr.bf16.mxu0 0
        %622 = vmatpush1.bf16.msra.mxu0 %v577
        %623 = vmatprep.subr.bf16.mxu0 0
        %624 = vmatpush1.bf16.msra.mxu0 %v576
        %625 = vmatprep.subr.bf16.mxu0 0
        %626 = vmatpush1.bf16.msra.mxu0 %v575
        %627 = vmatprep.subr.bf16.mxu0 0
        %628 = vmatpush1.bf16.msra.mxu0 %v574
        %629 = vmatprep.subr.bf16.mxu0 0
        %630 = vmatpush1.bf16.msra.mxu0 %v573
        %631 = vmatprep.subr.bf16.mxu0 0
        %632 = vmatpush1.bf16.msra.mxu0 %v572
        %633 = vmatprep.subr.bf16.mxu0 0
        %634 = vmatpush1.bf16.msra.mxu0 %v571
        %635 = vmatprep.subr.bf16.mxu0 0
        %636 = vmatpush2.bf16.msra.mxu0 %v586
        %637 = vmatprep.subr.bf16.mxu0 0
        %638 = vmatpush2.bf16.msra.mxu0 %v585
        %639 = vmatprep.subr.bf16.mxu0 0
        %640 = vmatpush2.bf16.msra.mxu0 %v584
        %641 = vmatprep.subr.bf16.mxu0 0
        %642 = vmatpush2.bf16.msra.mxu0 %v583
        %643 = vmatprep.subr.bf16.mxu0 0
        %644 = vmatpush2.bf16.msra.mxu0 %v582
        %645 = vmatprep.subr.bf16.mxu0 0
        %646 = vmatpush2.bf16.msra.mxu0 %v581
        %647 = vmatprep.subr.bf16.mxu0 0
        %648 = vmatpush2.bf16.msra.mxu0 %v580
        %649 = vmatprep.subr.bf16.mxu0 0
        %650 = vmatpush2.bf16.msra.mxu0 %v579
        %651 = vmatprep.mubr.bf16.mxu0 %v470
        %652 = vmatmul.mubr.bf16.gmra.mxu0 %v469
        %v653 = vpop.f32.mrf.mxu0
        %v654 = vadd.f32 0.0, %v653
        %v655 = vpop.f32.mrf.mxu0
        %v656 = vpop.f32.mrf.mxu0
        %v657 = vadd.f32 0.0, %v656
        %v658 = vpop.f32.mrf.mxu0
        %659 = vdwg.mxu0
        %660 = vmatprep.subr.bf16.mxu0 0
        %661 = vmatpush1.bf16.msra.mxu0 %v594
        %662 = vmatprep.subr.bf16.mxu0 0
        %663 = vmatpush1.bf16.msra.mxu0 %v593
        %664 = vmatprep.subr.bf16.mxu0 0
        %665 = vmatpush1.bf16.msra.mxu0 %v592
        %666 = vmatprep.subr.bf16.mxu0 0
        %667 = vmatpush1.bf16.msra.mxu0 %v591
        %668 = vmatprep.subr.bf16.mxu0 0
        %669 = vmatpush1.bf16.msra.mxu0 %v590
        %670 = vmatprep.subr.bf16.mxu0 0
        %671 = vmatpush1.bf16.msra.mxu0 %v589
        %672 = vmatprep.subr.bf16.mxu0 0
        %673 = vmatpush1.bf16.msra.mxu0 %v588
        %674 = vmatprep.subr.bf16.mxu0 0
        %675 = vmatpush1.bf16.msra.mxu0 %v587
        %676 = vmatprep.subr.bf16.mxu0 0
        %677 = vmatpush2.bf16.msra.mxu0 0
        %678 = vmatprep.subr.bf16.mxu0 0
        %679 = vmatpush2.bf16.msra.mxu0 0
        %680 = vmatprep.subr.bf16.mxu0 0
        %681 = vmatpush2.bf16.msra.mxu0 0
        %682 = vmatprep.subr.bf16.mxu0 0
        %683 = vmatpush2.bf16.msra.mxu0 0
        %684 = vmatprep.subr.bf16.mxu0 0
        %685 = vmatpush2.bf16.msra.mxu0 0
        %686 = vmatprep.subr.bf16.mxu0 0
        %687 = vmatpush2.bf16.msra.mxu0 0
        %688 = vmatprep.subr.bf16.mxu0 0
        %689 = vmatpush2.bf16.msra.mxu0 0
        %690 = vmatprep.subr.bf16.mxu0 0
        %691 = vmatpush2.bf16.msra.mxu0 0
        %692 = vmatprep.mubr.bf16.mxu0 0
        %693 = vmatmul.mubr.bf16.gmra.mxu0 %v471
        %v694 = vpop.f32.mrf.mxu0
        %v695 = vadd.f32 %v654, %v694
        %v696 = vpop.f32.mrf.mxu0
        %v697 = vpop.f32.mrf.mxu0
        %v698 = vadd.f32 %v657, %v697
        %v699 = vpop.f32.mrf.mxu0
        %700 = vdwg.mxu0
        %v701 = vadd.f32 %v453, %v695
        %v702 = vadd.f32 %v454, %v698
        %703 = vst [vmem:[#allocation2] sm:$0xff] %v701
        %704 = vst [vmem:[#allocation2 + $0x8] sm:$0xff] %v702
        // Predicated region
        $region69: #{tpu_custom_call.1} parent=43 // pred_check
          %p705 = pneg %p399
        $region70: #{tpu_custom_call.1} parent=43 // pred_check_branch
          %707 = sbr.rel (%p705) target = $region72
        $region71: #{tpu_custom_call.1} parent=43 // pred_region
          %v708 = vld [vmem:[%s328] sm:$0xf]
          %v709 = vld [vmem:[%s328 + $0x4] sm:$0xf]
          %v710 = vld [vmem:[#allocation2] sm:$0xff]
          %v711 = vld [vmem:[#allocation2 + $0x8] sm:$0xff]
          %v712 = vpack.c.bf16 %v711, %v710
          %v713 = vld [vmem:[%s337] sm:$0xf]
          %v714 = vld [vmem:[%s337 + $0x4] sm:$0xf]
          %v717 = vunpack.c.l.b16 %v708
          %v718 = vunpack.c.l.b16 %v709
          %v719 = vpack.c.b16 %v718, %v717
          %v723 = vunpack.c.l.b16 %v713
          %v724 = vunpack.c.l.b16 %v714
          %v725 = vpack.c.b16 %v724, %v723
          %v727 = vld [vmem:[#allocation11] sm:$0xf]
          %v728 = vld [vmem:[#allocation11 + $0x4] sm:$0xf]
          %v729 = vld [vmem:[#allocation11 + $0x8] sm:$0xf]
          %v730 = vld [vmem:[#allocation11 + $0xc] sm:$0xf]
          %v731 = vld [vmem:[#allocation11 + $0x10] sm:$0xf]
          %v732 = vld [vmem:[#allocation11 + $0x14] sm:$0xf]
          %v733 = vld [vmem:[#allocation11 + $0x18] sm:$0xf]
          %v734 = vld [vmem:[#allocation11 + $0x1c] sm:$0xf]
          %v735 = vld [vmem:[#allocation11 + $0x20] sm:$0xf]
          %v736 = vld [vmem:[#allocation11 + $0x24] sm:$0xf]
          %v737 = vld [vmem:[#allocation11 + $0x28] sm:$0xf]
          %v738 = vld [vmem:[#allocation11 + $0x2c] sm:$0xf]
          %v739 = vld [vmem:[#allocation11 + $0x30] sm:$0xf]
          %v740 = vld [vmem:[#allocation11 + $0x34] sm:$0xf]
          %v741 = vld [vmem:[#allocation11 + $0x38] sm:$0xf]
          %v742 = vld [vmem:[#allocation11 + $0x3c] sm:$0xf]
          %v743 = vld [vmem:[#allocation11 + $0x40] sm:$0xf]
          %v744 = vld [vmem:[#allocation11 + $0x44] sm:$0xf]
          %v745 = vld [vmem:[#allocation11 + $0x48] sm:$0xf]
          %v746 = vld [vmem:[#allocation11 + $0x4c] sm:$0xf]
          %v747 = vld [vmem:[#allocation11 + $0x50] sm:$0xf]
          %v748 = vld [vmem:[#allocation11 + $0x54] sm:$0xf]
          %v749 = vld [vmem:[#allocation11 + $0x58] sm:$0xf]
          %v750 = vld [vmem:[#allocation11 + $0x5c] sm:$0xf]
          %v751 = vld [vmem:[#allocation11 + $0x60] sm:$0xf]
          %v752 = vld [vmem:[#allocation11 + $0x64] sm:$0xf]
          %v753 = vld [vmem:[#allocation11 + $0x68] sm:$0xf]
          %v754 = vld [vmem:[#allocation11 + $0x6c] sm:$0xf]
          %v755 = vld [vmem:[#allocation11 + $0x70] sm:$0xf]
          %v756 = vld [vmem:[#allocation11 + $0x74] sm:$0xf]
          %v757 = vld [vmem:[#allocation11 + $0x78] sm:$0xf]
          %v758 = vld [vmem:[#allocation11 + $0x7c] sm:$0xf]
          %v759 = vld [vmem:[#allocation11 + $0x80] sm:$0xf]
          %v760 = vld [vmem:[#allocation11 + $0x84] sm:$0xf]
          %v761 = vld [vmem:[#allocation11 + $0x88] sm:$0xf]
          %v762 = vld [vmem:[#allocation11 + $0x8c] sm:$0xf]
          %v763 = vld [vmem:[#allocation11 + $0x90] sm:$0xf]
          %v764 = vld [vmem:[#allocation11 + $0x94] sm:$0xf]
          %v765 = vld [vmem:[#allocation11 + $0x98] sm:$0xf]
          %v766 = vld [vmem:[#allocation11 + $0x9c] sm:$0xf]
          %v767 = vld [vmem:[#allocation11 + $0xa0] sm:$0xf]
          %v768 = vld [vmem:[#allocation11 + $0xa4] sm:$0xf]
          %v769 = vld [vmem:[#allocation11 + $0xa8] sm:$0xf]
          %v770 = vld [vmem:[#allocation11 + $0xac] sm:$0xf]
          %v771 = vld [vmem:[#allocation11 + $0xb0] sm:$0xf]
          %v772 = vld [vmem:[#allocation11 + $0xb4] sm:$0xf]
          %v773 = vld [vmem:[#allocation11 + $0xb8] sm:$0xf]
          %v774 = vld [vmem:[#allocation11 + $0xbc] sm:$0xf]
          %v775 = vld [vmem:[%s5] sm:$0x1]
          %v777 = vlaneseq
          %v778 = vshrl.u32 %v777, 7
          %v779 = vsub.s32 0, %v778
          %v780 = vrot.slane %v775, %v779
          %v830 = vunpack.c.l.b16 %v727
          %v831 = vunpack.c.l.b16 %v728
          %v832 = vunpack.c.l.b16 %v729
          %v833 = vunpack.c.l.b16 %v730
          %v834 = vunpack.c.l.b16 %v731
          %v835 = vunpack.c.l.b16 %v732
          %v836 = vunpack.c.l.b16 %v733
          %v837 = vunpack.c.l.b16 %v734
          %v838 = vunpack.c.l.b16 %v735
          %v839 = vunpack.c.l.b16 %v736
          %v840 = vunpack.c.l.b16 %v737
          %v841 = vunpack.c.l.b16 %v738
          %v842 = vunpack.c.l.b16 %v739
          %v843 = vunpack.c.l.b16 %v740
          %v844 = vunpack.c.l.b16 %v741
          %v845 = vunpack.c.l.b16 %v742
          %v846 = vunpack.c.l.b16 %v743
          %v847 = vunpack.c.l.b16 %v744
          %v848 = vunpack.c.l.b16 %v745
          %v849 = vunpack.c.l.b16 %v746
          %v850 = vunpack.c.l.b16 %v747
          %v851 = vunpack.c.l.b16 %v748
          %v852 = vunpack.c.l.b16 %v749
          %v853 = vunpack.c.l.b16 %v750
          %v854 = vunpack.c.l.b16 %v751
          %v855 = vunpack.c.l.b16 %v752
          %v856 = vunpack.c.l.b16 %v753
          %v857 = vunpack.c.l.b16 %v754
          %v858 = vunpack.c.l.b16 %v755
          %v859 = vunpack.c.l.b16 %v756
          %v860 = vunpack.c.l.b16 %v757
          %v861 = vunpack.c.l.b16 %v758
          %v862 = vunpack.c.l.b16 %v759
          %v863 = vunpack.c.l.b16 %v760
          %v864 = vunpack.c.l.b16 %v761
          %v865 = vunpack.c.l.b16 %v762
          %v866 = vunpack.c.l.b16 %v763
          %v867 = vunpack.c.l.b16 %v764
          %v868 = vunpack.c.l.b16 %v765
          %v869 = vunpack.c.l.b16 %v766
          %v870 = vunpack.c.l.b16 %v767
          %v871 = vunpack.c.l.b16 %v768
          %v872 = vunpack.c.l.b16 %v769
          %v873 = vunpack.c.l.b16 %v770
          %v874 = vunpack.c.l.b16 %v771
          %v875 = vunpack.c.l.b16 %v772
          %v876 = vunpack.c.l.b16 %v773
          %v877 = vunpack.c.l.b16 %v774
          %v878 = vpack.c.b16 %v831, %v830
          %v879 = vpack.c.b16 %v833, %v832
          %v880 = vpack.c.b16 %v835, %v834
          %v881 = vpack.c.b16 %v837, %v836
          %v882 = vpack.c.b16 %v839, %v838
          %v883 = vpack.c.b16 %v841, %v840
          %v884 = vpack.c.b16 %v843, %v842
          %v885 = vpack.c.b16 %v845, %v844
          %v886 = vpack.c.b16 %v847, %v846
          %v887 = vpack.c.b16 %v849, %v848
          %v888 = vpack.c.b16 %v851, %v850
          %v889 = vpack.c.b16 %v853, %v852
          %v890 = vpack.c.b16 %v855, %v854
          %v891 = vpack.c.b16 %v857, %v856
          %v892 = vpack.c.b16 %v859, %v858
          %v893 = vpack.c.b16 %v861, %v860
          %v894 = vpack.c.b16 %v863, %v862
          %v895 = vpack.c.b16 %v865, %v864
          %v896 = vpack.c.b16 %v867, %v866
          %v897 = vpack.c.b16 %v869, %v868
          %v898 = vpack.c.b16 %v871, %v870
          %v899 = vpack.c.b16 %v873, %v872
          %v900 = vpack.c.b16 %v875, %v874
          %v901 = vpack.c.b16 %v877, %v876
          %926 = vmatprep.subr.bf16.mxu0 0
          %927 = vmatpush1.bf16.msra.mxu0 %v885
          %928 = vmatprep.subr.bf16.mxu0 0
          %929 = vmatpush1.bf16.msra.mxu0 %v884
          %930 = vmatprep.subr.bf16.mxu0 0
          %931 = vmatpush1.bf16.msra.mxu0 %v883
          %932 = vmatprep.subr.bf16.mxu0 0
          %933 = vmatpush1.bf16.msra.mxu0 %v882
          %934 = vmatprep.subr.bf16.mxu0 0
          %935 = vmatpush1.bf16.msra.mxu0 %v881
          %936 = vmatprep.subr.bf16.mxu0 0
          %937 = vmatpush1.bf16.msra.mxu0 %v880
          %938 = vmatprep.subr.bf16.mxu0 0
          %939 = vmatpush1.bf16.msra.mxu0 %v879
          %940 = vmatprep.subr.bf16.mxu0 0
          %941 = vmatpush1.bf16.msra.mxu0 %v878
          %942 = vmatprep.subr.bf16.mxu0 0
          %943 = vmatpush2.bf16.msra.mxu0 %v893
          %944 = vmatprep.subr.bf16.mxu0 0
          %945 = vmatpush2.bf16.msra.mxu0 %v892
          %946 = vmatprep.subr.bf16.mxu0 0
          %947 = vmatpush2.bf16.msra.mxu0 %v891
          %948 = vmatprep.subr.bf16.mxu0 0
          %949 = vmatpush2.bf16.msra.mxu0 %v890
          %950 = vmatprep.subr.bf16.mxu0 0
          %951 = vmatpush2.bf16.msra.mxu0 %v889
          %952 = vmatprep.subr.bf16.mxu0 0
          %953 = vmatpush2.bf16.msra.mxu0 %v888
          %954 = vmatprep.subr.bf16.mxu0 0
          %955 = vmatpush2.bf16.msra.mxu0 %v887
          %956 = vmatprep.subr.bf16.mxu0 0
          %957 = vmatpush2.bf16.msra.mxu0 %v886
          %958 = vmatprep.mubr.bf16.mxu0 %v712
          %959 = vmatmul.mubr.bf16.gmra.mxu0 %v719
          %v960 = vpop.f32.mrf.mxu0
          %v961 = vadd.f32 %v780, %v960
          %v962 = vpop.f32.mrf.mxu0
          %v963 = vpop.f32.mrf.mxu0
          %v964 = vadd.f32 %v780, %v963
          %v965 = vpop.f32.mrf.mxu0
          %966 = vdwg.mxu0
          %967 = vmatprep.subr.bf16.mxu0 0
          %968 = vmatpush1.bf16.msra.mxu0 %v901
          %969 = vmatprep.subr.bf16.mxu0 0
          %970 = vmatpush1.bf16.msra.mxu0 %v900
          %971 = vmatprep.subr.bf16.mxu0 0
          %972 = vmatpush1.bf16.msra.mxu0 %v899
          %973 = vmatprep.subr.bf16.mxu0 0
          %974 = vmatpush1.bf16.msra.mxu0 %v898
          %975 = vmatprep.subr.bf16.mxu0 0
          %976 = vmatpush1.bf16.msra.mxu0 %v897
          %977 = vmatprep.subr.bf16.mxu0 0
          %978 = vmatpush1.bf16.msra.mxu0 %v896
          %979 = vmatprep.subr.bf16.mxu0 0
          %980 = vmatpush1.bf16.msra.mxu0 %v895
          %981 = vmatprep.subr.bf16.mxu0 0
          %982 = vmatpush1.bf16.msra.mxu0 %v894
          %983 = vmatprep.subr.bf16.mxu0 0
          %984 = vmatpush2.bf16.msra.mxu0 0
          %985 = vmatprep.subr.bf16.mxu0 0
          %986 = vmatpush2.bf16.msra.mxu0 0
          %987 = vmatprep.subr.bf16.mxu0 0
          %988 = vmatpush2.bf16.msra.mxu0 0
          %989 = vmatprep.subr.bf16.mxu0 0
          %990 = vmatpush2.bf16.msra.mxu0 0
          %991 = vmatprep.subr.bf16.mxu0 0
          %992 = vmatpush2.bf16.msra.mxu0 0
          %993 = vmatprep.subr.bf16.mxu0 0
          %994 = vmatpush2.bf16.msra.mxu0 0
          %995 = vmatprep.subr.bf16.mxu0 0
          %996 = vmatpush2.bf16.msra.mxu0 0
          %997 = vmatprep.subr.bf16.mxu0 0
          %998 = vmatpush2.bf16.msra.mxu0 0
          %999 = vmatprep.mubr.bf16.mxu0 0
          %1000 = vmatmul.mubr.bf16.gmra.mxu0 %v725
          %v1001 = vpop.f32.mrf.mxu0
          %v1002 = vadd.f32 %v961, %v1001
          %v1003 = vpop.f32.mrf.mxu0
          %v1004 = vpop.f32.mrf.mxu0
          %v1005 = vadd.f32 %v964, %v1004
          %v1006 = vpop.f32.mrf.mxu0
          %1007 = vdwg.mxu0
          %v1008 = vmax.f32 %v1002, 0.0
          %v1009 = vmax.f32 %v1005, 0.0
          %1010 = vst [vmem:[%s392] sm:$0xff] %v1008
          %1011 = vst [vmem:[%s392 + $0x8] sm:$0xff] %v1009
        $region72: #{tpu_custom_call.1} parent=43 // pred_fallthru
          _
        %s1012 = sand.u32 %s190, 1
        %s1013 = scalar_lea.sflag [#allocation5], %s1012
        %s1014 = sand.u32 %s190, 1
        %s1015 = smul.addr %s1014, 16
        %s1016 = scalar_lea.vmem [#allocation12], %s1015
        // Predicated region
        $region73: #{tpu_custom_call.1} parent=43 // pred_check
          %p1017 = pneg %p200
        $region74: #{tpu_custom_call.1} parent=43 // pred_check_branch
          %1019 = sbr.rel (%p1017) target = $region76
        $region75: #{tpu_custom_call.1} parent=43 // pred_region
          %s1020 = smul.u32 2, %s31
          %s1022 = ssub.s32 256, 256
          %1023 = vsyncadd %s1013, %s1022
          %s1024 = smul.addr %s1020, 128
          %s1025 = scalar_lea.hbm %s6, %s1024
          %s1026 = sshll.u32 %s1016, 4
          %s1027 = int_to_ptr.vmem [resolvable:$true] %s1026
          %1032 = dma.vmem_to_hbm [thread:$0]  %s1027, 256, %s1025, %s1013, 128, 128, 8
        $region76: #{tpu_custom_call.1} parent=43 // pred_fallthru
          _
      $region44: #{tpu_custom_call.1} parent=5 // pred_fallthru
        _
      %p1033 = scmp.le.s32.totalorder 2, %s22
      // Predicated region
      $region77: #{tpu_custom_call.1} parent=5 // pred_check
        %p1034 = pneg %p1033
      $region78: #{tpu_custom_call.1} parent=5 // pred_check_branch
        %1036 = sbr.rel (%p1034) target = $region80
      $region79: #{tpu_custom_call.1} parent=5 // pred_region
        %s1037 = ssub.s32 %s22, 2
        // Predicated region
        $region81: #{tpu_custom_call.1} parent=79 // pred_check
          %p1038 = pneg %p206
        $region82: #{tpu_custom_call.1} parent=79 // pred_check_branch
          %1040 = sbr.rel (%p1038) target = $region84
        $region83: #{tpu_custom_call.1} parent=79 // pred_region
          %s1041 = sand.u32 %s191, 1
          %s1042 = scalar_lea.sflag [#allocation5], %s1041
          %s1043 = sand.u32 %s191, 1
          %s1044 = smul.addr %s1043, 16
          %s1045 = scalar_lea.vmem [#allocation12], %s1044
          %1046 = dma.done %s1042, 256
        $region84: #{tpu_custom_call.1} parent=79 // pred_fallthru
          _
      $region80: #{tpu_custom_call.1} parent=5 // pred_fallthru
        _
    $region6: #{tpu_custom_call.1} parent=1 // loop_footer
      %s26 = sadd.s32 1, %s22
    $region7: #{tpu_custom_call.1} parent=1 // loop_footer_branch
      %21 = sbr.rel target = $region3
    $region8: #{tpu_custom_call.1} parent=1 // loop_exit
      _
    %1047 = vsyncpa [#allocation4], 1
    %s1048 = scalar_lea.sflag [#allocation4], 1
    %1049 = vsyncpa %s1048, 1
    %1050 = vsyncpa [#allocation7], 1
    %s1051 = scalar_lea.sflag [#allocation7], 1
    %1052 = vsyncpa %s1051, 1
    %1053 = vsyncpa [#allocation10], 1
    %1054 = vsyncpa [#allocation5], 1
    %s1055 = scalar_lea.sflag [#allocation5], 1
    %1056 = vsyncpa %s1055, 1

</llo_original>
